<compile_context>
chip_gen: v7x
topology: tpu7x:2x2x1
jax: 0.10.0
libtpu: 0.0.40
codegen_flags: <defaults>
</compile_context>

<pallas_src>
import jax
import jax.numpy as jnp
from jax.experimental import pallas as pl
from jax.experimental.pallas import tpu as pltpu

OBS_DIM = 2
STATE_DIM = 5


def belief_step_kernel(x_ref, z_ref, o_ref):
    # x_ref: (STATE_DIM, TB); z_ref, o_ref: (OBS_DIM, TB); batch on the lane axis.
    # H is the module's static 2-hot selector (H[0,-2]=1, H[1,-1]=1), so
    # H @ x == x[STATE_DIM-OBS_DIM:, :].  Two VPU adds, one dense (2, TB) store.
    o_ref[...] = x_ref[STATE_DIM - OBS_DIM:, :] + z_ref[...]


def belief_step(x, zita, *, H=None, tb=None):
    """Batched o = H @ x + zita with the batch on the lane axis.

    x    : (STATE_DIM, B) float32  -- agent states, lane-major (kept this way
                                      persistently; no per-call reshape copies)
    zita : (OBS_DIM, B)   float32  -- observation noise, lane-major
    H    : optional (OBS_DIM, STATE_DIM) selector.  Only used to verify it
           matches the module's fixed 2-hot selector, which is baked into the
           kernel (it is never DMA'd).
    tb   : lane tile size (multiple of 128), or None to auto-pick.
    returns (OBS_DIM, B) float32
    """
    state_dim, B = x.shape
    obs_dim, B2 = zita.shape
    assert state_dim == STATE_DIM and obs_dim == OBS_DIM and B == B2

    if H is not None:
        # H is compile-time static in the module; verify then bake it in.
        expected = (jnp.zeros((OBS_DIM, STATE_DIM), jnp.float32)
                    .at[0, -2].set(1.0).at[1, -1].set(1.0))
        if not bool(jnp.array_equal(jnp.asarray(H, jnp.float32), expected)):
            raise ValueError("kernel bakes in the module's fixed 2-hot selector H")

    x = x.astype(jnp.float32)
    zita = zita.astype(jnp.float32)

    # Lane tile: whole batch in one tile when small (full-dim block is always
    # legal), otherwise a multiple of 128 in the 512-2048 sweet spot.
    if tb is None:
        tb = B if B <= 2048 else 1024
    if tb >= B:
        tb = B
    else:
        tb = max(128, (tb // 128) * 128)

    # Pad the batch so the lane tile divides it exactly (rare; cheap).
    n_tiles = pl.cdiv(B, tb)
    Bp = tb * n_tiles
    if Bp != B:
        x = jnp.pad(x, ((0, 0), (0, Bp - B)))
        zita = jnp.pad(zita, ((0, 0), (0, Bp - B)))

    out = pl.pallas_call(
        belief_step_kernel,
        out_shape=jax.ShapeDtypeStruct((OBS_DIM, Bp), jnp.float32),
        grid=(n_tiles,),
        in_specs=[
            pl.BlockSpec((STATE_DIM, tb), lambda b: (0, b)),  # x tile (lane-dense)
            pl.BlockSpec((OBS_DIM, tb), lambda b: (0, b)),    # zita tile
        ],
        out_specs=pl.BlockSpec((OBS_DIM, tb), lambda b: (0, b)),
        compiler_params=pltpu.CompilerParams(
            dimension_semantics=("parallel",),  # shard tiles across TCs on v7x
        ),
        cost_estimate=pl.CostEstimate(
            flops=OBS_DIM * Bp,                                 # 2 adds / element
            transcendentals=0,
            bytes_accessed=4 * Bp * (STATE_DIM + 2 * OBS_DIM),  # x + zita + out
        ),
    )(x, zita)

    return out[:, :B] if Bp != B else out


if __name__ == "__main__":
    key = jax.random.PRNGKey(0)
    k_state, k_unif, k_noise = jax.random.split(key, 3)

    B = 256    # batch of agent steps sharing one pallas_call
    TB = 128   # lane tile (multiple of 128) -> grid=(2,), exercises tiling

    # --- deterministic "module init": H[0,-2]=1, H[1,-1]=1 (static selector) ---
    H = (jnp.zeros((OBS_DIM, STATE_DIM), jnp.float32)
         .at[0, -2].set(1.0).at[1, -1].set(1.0))

    # reset(): obs_noise_std = Uniform(obs_noise_range) * pro_gains
    obs_noise_range = (0.0, 0.1)
    pro_gains = jnp.array([0.4, 1.57], jnp.float32)  # (linear, angular) gains
    u = jax.random.uniform(k_unif, (1,), minval=obs_noise_range[0],
                           maxval=obs_noise_range[1])
    obs_noise_std = u * pro_gains  # (OBS_DIM,)

    # forward(): zita = (obs_noise_std * randn(OBS_DIM)).view(-1, 1) per step,
    # batched with the batch on the lane axis -> (OBS_DIM, B).
    # (torch RNG reproduced with jax.random as glue outside the kernel.)
    zita = (obs_noise_std[:, None]
            * jax.random.normal(k_noise, (OBS_DIM, B))).astype(jnp.float32)

    # agent states, kept persistently in lane-major (STATE_DIM, B) layout
    x = jax.random.normal(k_state, (STATE_DIM, B), jnp.float32)

    o_t = belief_step(x, zita, H=H, tb=TB)
    o_t = jax.block_until_ready(o_t)

    # sanity check vs plain-JAX reference: o_b = H @ x_b + zita_b
    ref = jnp.einsum("os,sb->ob", H, x) + zita
    assert o_t.shape == (OBS_DIM, B)
    assert jnp.allclose(o_t, ref, atol=1e-5), (o_t, ref)

    print("KERNEL_OK")
</pallas_src>

<mosaic_0001>
module attributes {stable_mosaic.version = 11 : i64} {
  func.func @belief_step_kernel(%arg0: i32, %arg1: memref<5x128xf32, #tpu.memory_space<vmem>>, %arg2: memref<2x128xf32, #tpu.memory_space<vmem>>, %arg3: memref<2x128xf32, #tpu.memory_space<vmem>>) attributes {dimension_semantics = [#tpu.dimension_semantics<parallel>], iteration_bounds = array<i64: 2>, scalar_prefetch = 0 : i64, scratch_operands = 0 : i64, tpu.core_type = #tpu.core_type<tc>, window_params = [{transform_indices = @transform_0, window_bounds = array<i64: 5, 128>}, {transform_indices = @transform_1, window_bounds = array<i64: 2, 128>}, {transform_indices = @transform_2, window_bounds = array<i64: 2, 128>}]} {
    %c3 = arith.constant 3 : index
    %c0 = arith.constant 0 : index
    %0 = vector.load %arg1[%c3, %c0] : memref<5x128xf32, #tpu.memory_space<vmem>>, vector<2x128xf32>
    %c0_0 = arith.constant 0 : index
    %c0_1 = arith.constant 0 : index
    %1 = vector.load %arg2[%c0_0, %c0_1] : memref<2x128xf32, #tpu.memory_space<vmem>>, vector<2x128xf32>
    %2 = arith.addf %0, %1 : vector<2x128xf32>
    %c0_2 = arith.constant 0 : index
    %c0_3 = arith.constant 0 : index
    %3 = vector.load %arg3[%c0_2, %c0_3] : memref<2x128xf32, #tpu.memory_space<vmem>>, vector<2x128xf32>
    tpu.vector_store %arg3[%c0_2, %c0_3], %2 {strides = array<i32>} : memref<2x128xf32, #tpu.memory_space<vmem>>, vector<2x128xf32>,
    return
  }
  func.func @transform_0(%arg0: i32) -> (i32, i32) {
    %c0_i32 = arith.constant 0 : i32
    %c0_i32_0 = arith.constant 0 : i32
    return %c0_i32, %arg0 : i32, i32
  }
  func.func @transform_1(%arg0: i32) -> (i32, i32) {
    %c0_i32 = arith.constant 0 : i32
    %c0_i32_0 = arith.constant 0 : i32
    return %c0_i32, %arg0 : i32, i32
  }
  func.func @transform_2(%arg0: i32) -> (i32, i32) {
    %c0_i32 = arith.constant 0 : i32
    %c0_i32_0 = arith.constant 0 : i32
    return %c0_i32, %arg0 : i32, i32
  }
}

</mosaic_0001>

<llo_original>
// kernel: tpu_custom_call.1
$region0: #{tpu_custom_call.1}
  #allocation0 [shape = 'u32[]', space=smem, size = 0x4, offset = 0x4, fixed_abs, tag = 'smem constant byte address 0x4 - core index']
  #allocation1 [shape = 'u32[144,128]{1,0:T(1,128)}', space=vmem, size = 0x12000, scoped, tag = 'internal scratch']
  %s0 = inlined_call_operand.hbm [shape: f32[5,256], index: 0, kind: input, shape index: {}]
  %s1 = inlined_call_operand.hbm [shape: f32[2,256], index: 1, kind: input, shape index: {}]
  %s2 = inlined_call_operand.hbm [shape: f32[2,256], index: 2, kind: output, shape index: {}]
  %s3 = sld [smem:[#allocation0]]
  $region49: #{tpu_custom_call.1} parent=0
    _
  %s5 = ssub.s32 1, %s3
  %s6 = scalar_select 0, %s5, %s3
  $region1: #{tpu_custom_call.1} parent=0
    #allocation2 [shape = 'u8[8192]{0}', space=vmem, size = 0x2000, scoped, tag = 'input window, operand 0']
    #allocation3 [shape = 's32[2]{0}', space=sflag, size = 0x8, scoped, tag = 'scoped memory for tpu_custom_call.1']
    #allocation4 [shape = 's32[2]{0}', space=sflag, size = 0x8, scoped, tag = 'scoped memory for tpu_custom_call.1']
    #allocation5 [shape = 'u8[2048]{0}', space=vmem, size = 0x800, scoped, tag = 'input window, operand 1']
    #allocation6 [shape = 's32[2]{0}', space=sflag, size = 0x8, scoped, tag = 'scoped memory for tpu_custom_call.1']
    #allocation7 [shape = 'u8[2048]{0}', space=vmem, size = 0x800, scoped, tag = 'output window, operand 0']
    %7 = vsyncpa [#allocation3], 0
    %s8 = scalar_lea.sflag [#allocation3], 1
    %9 = vsyncpa %s8, 0
    %10 = vsyncpa [#allocation6], 0
    %s11 = scalar_lea.sflag [#allocation6], 1
    %12 = vsyncpa %s11, 0
    %13 = vsyncpa [#allocation4], 0
    %s14 = scalar_lea.sflag [#allocation4], 1
    %15 = vsyncpa %s14, 0
    loop: start=0, step=1, limit=4
    $region2: #{tpu_custom_call.1} parent=1 // loop_pre_header
      _
    $region3: #{tpu_custom_call.1} parent=1 // loop_header
      %s17 = sphi 0, %s21
      %p18 = scmp.ge.s32.totalorder %s17, 4
      %s27 = sphi 0, %s29
      %s30 = sphi 0, %s27
      %s31 = sphi 0, %s30
      %s47 = sphi 0, %s31
      %s53 = sphi 0, %s55
      %s56 = sphi 0, %s53
      %s57 = sphi 0, %s56
      %s73 = sphi 0, %s57
      %s79 = sphi 0, %s81
      %s82 = sphi 0, %s79
      %s83 = sphi 0, %s82
      %s99 = sphi 0, %s83
    $region4: #{tpu_custom_call.1} parent=1 // loop_header_branch
      %20 = sbr.rel (%p18) target = $region8
    $region5: #{tpu_custom_call.1} parent=1 // loop_body
      %s22 = ssub.s32 %s17, 1
      %s23 = ssub.s32 %s17, 2
      %s24 = sadd.s32 %s17, 1
      %s25 = ssub.s32 %s17, %s24
      %p26 = scmp.eq.s32.totalorder %s25, 0
      %s28 = sadd.s32 %s27, 1
      %s29 = scalar_select %p26, %s27, %s28
      %p32 = pneg %p26
      %p33 = scmp.eq.s32.totalorder %s17, 1
      %p34 = por %p32, %p33
      %p35 = scmp.ne.s32.totalorder %s27, %s30
      %p36 = scmp.eq.s32.totalorder %s17, 0
      %p37 = por %p35, %p36
      %p38 = scmp.ne.s32.totalorder %s27, %s30
      %p39 = scmp.eq.s32.totalorder %s22, 1
      %p40 = por %p38, %p39
      %p41 = scmp.ne.s32.totalorder %s30, %s31
      %p42 = scmp.eq.s32.totalorder %s22, 0
      %p43 = por %p41, %p42
      %p44 = scmp.ne.s32.totalorder %s30, %s31
      %p45 = scmp.eq.s32.totalorder %s23, 1
      %p46 = por %p44, %p45
      %p48 = scmp.ne.s32.totalorder %s31, %s47
      %p49 = scmp.eq.s32.totalorder %s23, 0
      %p50 = por %p48, %p49
      %s51 = ssub.s32 %s17, %s24
      %p52 = scmp.eq.s32.totalorder %s51, 0
      %s54 = sadd.s32 %s53, 1
      %s55 = scalar_select %p52, %s53, %s54
      %p58 = pneg %p52
      %p59 = scmp.eq.s32.totalorder %s17, 1
      %p60 = por %p58, %p59
      %p61 = scmp.ne.s32.totalorder %s53, %s56
      %p62 = scmp.eq.s32.totalorder %s17, 0
      %p63 = por %p61, %p62
      %p64 = scmp.ne.s32.totalorder %s53, %s56
      %p65 = scmp.eq.s32.totalorder %s22, 1
      %p66 = por %p64, %p65
      %p67 = scmp.ne.s32.totalorder %s56, %s57
      %p68 = scmp.eq.s32.totalorder %s22, 0
      %p69 = por %p67, %p68
      %p70 = scmp.ne.s32.totalorder %s56, %s57
      %p71 = scmp.eq.s32.totalorder %s23, 1
      %p72 = por %p70, %p71
      %p74 = scmp.ne.s32.totalorder %s57, %s73
      %p75 = scmp.eq.s32.totalorder %s23, 0
      %p76 = por %p74, %p75
      %s77 = ssub.s32 %s17, %s24
      %p78 = scmp.eq.s32.totalorder %s77, 0
      %s80 = sadd.s32 %s79, 1
      %s81 = scalar_select %p78, %s79, %s80
      %p84 = pneg %p78
      %p85 = scmp.eq.s32.totalorder %s17, 1
      %p86 = por %p84, %p85
      %p87 = scmp.ne.s32.totalorder %s79, %s82
      %p88 = scmp.eq.s32.totalorder %s17, 0
      %p89 = por %p87, %p88
      %p90 = scmp.ne.s32.totalorder %s79, %s82
      %p91 = scmp.eq.s32.totalorder %s22, 1
      %p92 = por %p90, %p91
      %p93 = scmp.ne.s32.totalorder %s82, %s83
      %p94 = scmp.eq.s32.totalorder %s22, 0
      %p95 = por %p93, %p94
      %p96 = scmp.ne.s32.totalorder %s82, %s83
      %p97 = scmp.eq.s32.totalorder %s23, 1
      %p98 = por %p96, %p97
      %p100 = scmp.ne.s32.totalorder %s83, %s99
      %p101 = scmp.eq.s32.totalorder %s23, 0
      %p102 = por %p100, %p101
      %p103 = scmp.le.s32.totalorder 1, %s17
      %p104 = scmp.lt.s32.totalorder %s17, 3
      %p105 = pnand %p103, %p104
      %p106 = pneg %p105
      // Predicated region
      $region9: #{tpu_custom_call.1} parent=5 // pred_check
        _
      $region10: #{tpu_custom_call.1} parent=5 // pred_check_branch
        %108 = sbr.rel (%p105) target = $region12
      $region11: #{tpu_custom_call.1} parent=5 // pred_region
        %s109 = ssub.s32 %s17, 1
      $region12: #{tpu_custom_call.1} parent=5 // pred_fallthru
        _
      %p110 = scmp.lt.s32.totalorder %s17, 2
      // Predicated region
      $region13: #{tpu_custom_call.1} parent=5 // pred_check
        %p111 = pneg %p110
      $region14: #{tpu_custom_call.1} parent=5 // pred_check_branch
        %113 = sbr.rel (%p111) target = $region16
      $region15: #{tpu_custom_call.1} parent=5 // pred_region
        // Predicated region
        $region17: #{tpu_custom_call.1} parent=15 // pred_check
          %p114 = pneg %p37
        $region18: #{tpu_custom_call.1} parent=15 // pred_check_branch
          %116 = sbr.rel (%p114) target = $region20
        $region19: #{tpu_custom_call.1} parent=15 // pred_region
          %s117 = sand.u32 %s27, 1
          %s118 = scalar_lea.sflag [#allocation3], %s117
          %s119 = sand.u32 %s27, 1
          %s120 = smul.addr %s119, 8
          %s121 = scalar_lea.vmem [#allocation2], %s120
          %s123 = ssub.s32 128, 128
          %124 = vsyncadd %s118, %s123
          %s125 = smul.addr %s17, 128
          %s126 = scalar_lea.hbm %s0, %s125
          %s128 = sshll.u32 %s121, 4
          %s129 = int_to_ptr.vmem [resolvable:$true] %s128
          %131 = dma.hbm_to_vmem [thread:$0]  %s126, 128, %s129, %s118
        $region20: #{tpu_custom_call.1} parent=15 // pred_fallthru
          _
        // Predicated region
        $region21: #{tpu_custom_call.1} parent=15 // pred_check
          %p132 = pneg %p63
        $region22: #{tpu_custom_call.1} parent=15 // pred_check_branch
          %134 = sbr.rel (%p132) target = $region24
        $region23: #{tpu_custom_call.1} parent=15 // pred_region
          %s135 = sand.u32 %s53, 1
          %s136 = scalar_lea.sflag [#allocation6], %s135
          %s137 = sand.u32 %s53, 1
          %s138 = smul.addr %s137, 2
          %s139 = scalar_lea.vmem [#allocation5], %s138
          %s141 = ssub.s32 32, 32
          %142 = vsyncadd %s136, %s141
          %s143 = smul.addr %s17, 32
          %s144 = scalar_lea.hbm %s1, %s143
          %s146 = sshll.u32 %s139, 4
          %s147 = int_to_ptr.vmem [resolvable:$true] %s146
          %149 = dma.hbm_to_vmem [thread:$0]  %s144, 32, %s147, %s136
        $region24: #{tpu_custom_call.1} parent=15 // pred_fallthru
          _
      $region16: #{tpu_custom_call.1} parent=5 // pred_fallthru
        _
      %p150 = scmp.le.s32.totalorder 1, %s17
      %p151 = scmp.lt.s32.totalorder %s17, 3
      %p152 = pnand %p150, %p151
      %p153 = pneg %p152
      // Predicated region
      $region25: #{tpu_custom_call.1} parent=5 // pred_check
        _
      $region26: #{tpu_custom_call.1} parent=5 // pred_check_branch
        %155 = sbr.rel (%p152) target = $region28
      $region27: #{tpu_custom_call.1} parent=5 // pred_region
        %s156 = ssub.s32 %s17, 1
        %s157 = sand.u32 %s30, 1
        %s158 = scalar_lea.sflag [#allocation3], %s157
        %s159 = sand.u32 %s30, 1
        %s160 = smul.addr %s159, 8
        %s161 = scalar_lea.vmem [#allocation2], %s160
        // Predicated region
        $region29: #{tpu_custom_call.1} parent=27 // pred_check
          %p162 = pneg %p43
        $region30: #{tpu_custom_call.1} parent=27 // pred_check_branch
          %164 = sbr.rel (%p162) target = $region32
        $region31: #{tpu_custom_call.1} parent=27 // pred_region
          %165 = dma.done %s158, 128
        $region32: #{tpu_custom_call.1} parent=27 // pred_fallthru
          _
        %s166 = sand.u32 %s56, 1
        %s167 = scalar_lea.sflag [#allocation6], %s166
        %s168 = sand.u32 %s56, 1
        %s169 = smul.addr %s168, 2
        %s170 = scalar_lea.vmem [#allocation5], %s169
        // Predicated region
        $region33: #{tpu_custom_call.1} parent=27 // pred_check
          %p171 = pneg %p69
        $region34: #{tpu_custom_call.1} parent=27 // pred_check_branch
          %173 = sbr.rel (%p171) target = $region36
        $region35: #{tpu_custom_call.1} parent=27 // pred_region
          %174 = dma.done %s167, 32
        $region36: #{tpu_custom_call.1} parent=27 // pred_fallthru
          _
        %s175 = sand.u32 %s30, 1
        %s176 = scalar_lea.sflag [#allocation3], %s175
        %s177 = sand.u32 %s30, 1
        %s178 = smul.addr %s177, 8
        %s179 = scalar_lea.vmem [#allocation2], %s178
        %p180 = pneg %p43
        %p181 = pneg %p40
        %s182 = sand.u32 %s56, 1
        %s183 = scalar_lea.sflag [#allocation6], %s182
        %s184 = sand.u32 %s56, 1
        %s185 = smul.addr %s184, 2
        %s186 = scalar_lea.vmem [#allocation5], %s185
        %p187 = pneg %p69
        %p188 = pneg %p66
        %p189 = pneg %p95
        %p190 = pneg %p92
        %s191 = sand.u32 %s82, 1
        %s192 = scalar_lea.sflag [#allocation4], %s191
        %s193 = sand.u32 %s82, 1
        %s194 = smul.addr %s193, 2
        %s195 = scalar_lea.vmem [#allocation7], %s194
        %v196 = vld [vmem:[%s161 + $0x3] sm:$0x3]
        %v197 = vld [vmem:[%s170] sm:$0x3]
        %v198 = vadd.f32 %v196, %v197
        %199 = vst [vmem:[%s195] sm:$0x3] %v198
        %s200 = sand.u32 %s82, 1
        %s201 = scalar_lea.sflag [#allocation4], %s200
        %s202 = sand.u32 %s82, 1
        %s203 = smul.addr %s202, 2
        %s204 = scalar_lea.vmem [#allocation7], %s203
        // Predicated region
        $region37: #{tpu_custom_call.1} parent=27 // pred_check
          %p205 = pneg %p92
        $region38: #{tpu_custom_call.1} parent=27 // pred_check_branch
          %207 = sbr.rel (%p205) target = $region40
        $region39: #{tpu_custom_call.1} parent=27 // pred_region
          %s209 = ssub.s32 32, 32
          %210 = vsyncadd %s201, %s209
          %s211 = smul.addr %s22, 32
          %s212 = scalar_lea.hbm %s2, %s211
          %s214 = sshll.u32 %s204, 4
          %s215 = int_to_ptr.vmem [resolvable:$true] %s214
          %217 = dma.vmem_to_hbm [thread:$0]  %s215, 32, %s212, %s201
        $region40: #{tpu_custom_call.1} parent=27 // pred_fallthru
          _
      $region28: #{tpu_custom_call.1} parent=5 // pred_fallthru
        _
      %p218 = scmp.le.s32.totalorder 2, %s17
      // Predicated region
      $region41: #{tpu_custom_call.1} parent=5 // pred_check
        %p219 = pneg %p218
      $region42: #{tpu_custom_call.1} parent=5 // pred_check_branch
        %221 = sbr.rel (%p219) target = $region44
      $region43: #{tpu_custom_call.1} parent=5 // pred_region
        %s222 = ssub.s32 %s17, 2
        // Predicated region
        $region45: #{tpu_custom_call.1} parent=43 // pred_check
          %p223 = pneg %p98
        $region46: #{tpu_custom_call.1} parent=43 // pred_check_branch
          %225 = sbr.rel (%p223) target = $region48
        $region47: #{tpu_custom_call.1} parent=43 // pred_region
          %s226 = sand.u32 %s83, 1
          %s227 = scalar_lea.sflag [#allocation4], %s226
          %s228 = sand.u32 %s83, 1
          %s229 = smul.addr %s228, 2
          %s230 = scalar_lea.vmem [#allocation7], %s229
          %231 = dma.done %s227, 32
        $region48: #{tpu_custom_call.1} parent=43 // pred_fallthru
          _
      $region44: #{tpu_custom_call.1} parent=5 // pred_fallthru
        _
    $region6: #{tpu_custom_call.1} parent=1 // loop_footer
      %s21 = sadd.s32 1, %s17
    $region7: #{tpu_custom_call.1} parent=1 // loop_footer_branch
      %16 = sbr.rel target = $region3
    $region8: #{tpu_custom_call.1} parent=1 // loop_exit
      _
    %232 = vsyncpa [#allocation3], 1
    %s233 = scalar_lea.sflag [#allocation3], 1
    %234 = vsyncpa %s233, 1
    %235 = vsyncpa [#allocation6], 1
    %s236 = scalar_lea.sflag [#allocation6], 1
    %237 = vsyncpa %s236, 1
    %238 = vsyncpa [#allocation4], 1
    %s239 = scalar_lea.sflag [#allocation4], 1
    %240 = vsyncpa %s239, 1

</llo_original>
